<compile_context>
chip_gen: v7x
topology: tpu7x:2x2x1
jax: 0.10.0
libtpu: 0.0.40
codegen_flags: <defaults>
</compile_context>

<pallas_src>
import math

import jax
import jax.numpy as jnp
import numpy as np
from jax import lax
from jax.experimental import pallas as pl
from jax.experimental.pallas import tpu as pltpu


def _fold_matrix(sf: int) -> np.ndarray:
    """A[p, r, k] = 1 iff the original 3x3 kernel row-tap k (offset k-1 in
    upsampled space) lands on source-row offset r-1 for output parity p."""
    A = np.zeros((sf, 3, 3), dtype=np.float32)
    for p in range(sf):
        for k in range(3):
            A[p, (p + k - 1) // sf + 1, k] = 1.0
    return A


def _make_kernel(bblk: int, mrows: int, w_pad: int):
    # static tap order: row-major over (row shift r, column shift s), r,s in {0,1,2}
    taps = [(s, r * w_pad) for r in range(3) for s in range(3)]

    def kernel(x_ref, w_ref, shift_ref, o_ref, acc_ref):
        # x_ref:     (bblk, 3, R, Cin)  bf16  3 column-shifted zero-padded flat images
        # w_ref:     (9, Cin, N)        bf16  folded (upsample+conv+BN-scale) weights
        # shift_ref: (1, N)             f32   conv-bias + BN shift (per parity/channel)
        # o_ref:     (bblk, mrows, N)   bf16  parity classes packed along lanes
        # acc_ref:   (mrows, N)         f32   scratch accumulator
        shift = shift_ref[...]                           # hoisted out of all loops
        for i in range(bblk):                            # static unroll
            for t, (s_col, r_off) in enumerate(taps):    # static unroll, <=9 dots
                lhs = x_ref[i, s_col, r_off:r_off + mrows, :]   # sublane-aligned slice
                prod = jnp.dot(lhs, w_ref[t], preferred_element_type=jnp.float32)
                if t == 0:
                    acc_ref[...] = prod                  # no separate zero-init pass
                else:
                    acc_ref[...] += prod                 # accumulate in VMEM scratch
            o_ref[i] = jnp.maximum(acc_ref[...] + shift, 0.0).astype(o_ref.dtype)

    return kernel


def reconstruct_forward(x, weight, bias, gamma, beta, running_mean, running_var,
                        scale_factor=2, eps=1e-5):
    """x: (B, n_patch, hidden); weight: (Cout, Cin, 3, 3) PyTorch OIHW."""
    if x is None:
        return None
    B, n_patch, hidden = x.shape
    h = int(math.isqrt(n_patch))
    assert h * h == n_patch, "n_patch must be a perfect square"
    w = h
    sf = int(scale_factor)
    assert sf >= 1

    Cout, Cin, KH, KW = weight.shape
    assert Cin == hidden
    assert KH == 3 and KW == 3, "fused kernel supports kernel_size=3 only"

    # ---- geometry: "wide conv" over flattened rows, sublane-aligned row stride ----
    w_pad = 8 * pl.cdiv(w + 2, 8)        # >= w+2 and multiple of 8 (aligned row shifts)
    mrows = h * w_pad                    # flattened output rows; cols >= w are garbage
    R = (h + 2) * w_pad                  # flattened padded-source rows per column shift
    P2 = sf * sf
    N = 128 * pl.cdiv(P2 * Cout, 128)    # parity classes packed along lanes

    # ---- fold nearest-upsample + conv + BN scale into 9 per-shift weights ----
    A = jnp.asarray(_fold_matrix(sf))                       # (sf, 3, 3)
    s_bn = gamma / jnp.sqrt(running_var + eps)              # (Cout,)
    w_sc = weight.astype(jnp.float32) * s_bn[:, None, None, None]
    # wf[r, s, py, px, cin, cout]
    wf = jnp.einsum('prk,qsl,oikl->rspqio', A, A, w_sc)
    wf = wf.transpose(0, 1, 4, 2, 3, 5).reshape(9, Cin, P2 * Cout)
    wf = jnp.pad(wf, ((0, 0), (0, 0), (0, N - P2 * Cout))).astype(jnp.bfloat16)

    # conv bias + eval-mode BatchNorm shift (scale already folded into weights)
    shift_c = (bias - running_mean) * s_bn + beta
    shift = jnp.pad(jnp.tile(shift_c, P2), (0, N - P2 * Cout))
    shift = shift.reshape(1, N).astype(jnp.float32)

    # ---- 3 column-shifted, zero-padded, flattened NHWC sources (bf16) ----
    src = x.astype(jnp.bfloat16).reshape(B, h, w, Cin)       # n_patch is row-major (h, w)
    padded = jnp.pad(src, ((0, 0), (1, 1), (1, w_pad - w - 1), (0, 0)))
    flat = padded.reshape(B, R, Cin)
    flat = jnp.pad(flat, ((0, 0), (0, 2), (0, 0)))           # room for column shifts 1, 2
    x3 = jnp.stack([flat[:, s:s + R, :] for s in range(3)], axis=1)   # (B, 3, R, Cin)

    # ---- images per grid step: amortize step overhead when h*w is tiny ----
    bblk = min(B, max(1, 256 // mrows)) if mrows < 256 else 1
    if B >= 2:
        bblk = min(bblk, max(1, B // 2))   # keep >=2 grid steps so both TCs get work

    def _vmem_est(bb):                     # double-buffered activations/outputs + weights
        return (2 * bb * 3 * R * Cin * 2 + 2 * bb * mrows * N * 2
                + 2 * 9 * Cin * N * 2 + mrows * N * 4 + N * 4)

    while bblk > 1 and _vmem_est(bblk) > 40 * (1 << 20):
        bblk -= 1
    bpad = pl.cdiv(B, bblk) * bblk
    if bpad > B:
        x3 = jnp.pad(x3, ((0, bpad - B), (0, 0), (0, 0), (0, 0)))
    n_steps = bpad // bblk

    cost = pl.CostEstimate(
        flops=2 * bpad * 9 * mrows * Cin * N,
        transcendentals=0,
        bytes_accessed=(x3.size * 2 + wf.size * 2 + shift.size * 4
                        + bpad * mrows * N * 2),
    )

    kernel = _make_kernel(bblk, mrows, w_pad)
    out = pl.pallas_call(
        kernel,
        out_shape=jax.ShapeDtypeStruct((bpad, mrows, N), jnp.bfloat16),
        grid_spec=pltpu.PrefetchScalarGridSpec(
            num_scalar_prefetch=0,
            grid=(n_steps,),
            in_specs=[
                pl.BlockSpec((bblk, 3, R, Cin), lambda b: (b, 0, 0, 0)),
                # grid-invariant operands: constant index_map -> fetched only once
                pl.BlockSpec((9, Cin, N), lambda b: (0, 0, 0)),
                pl.BlockSpec((1, N), lambda b: (0, 0)),
            ],
            out_specs=pl.BlockSpec((bblk, mrows, N), lambda b: (b, 0, 0)),
            scratch_shapes=[pltpu.VMEM((mrows, N), jnp.float32)],
        ),
        compiler_params=pltpu.CompilerParams(
            dimension_semantics=("parallel",),
            vmem_limit_bytes=min(96 * (1 << 20),
                                 max(32 * (1 << 20), int(1.25 * _vmem_est(bblk)))),
        ),
        cost_estimate=cost,
    )(x3, wf, shift)

    # de-interleave: lanes are (py, px, cout); rows are (y, wide column c)
    out = out[:B, :, :P2 * Cout].reshape(B, h, w_pad, sf, sf, Cout)[:, :, :w]
    out = out.transpose(0, 5, 1, 3, 2, 4).reshape(B, Cout, h * sf, w * sf)
    return out.astype(x.dtype)


def reconstruct_reference(x, weight, bias, gamma, beta, running_mean, running_var,
                          scale_factor=2, eps=1e-5):
    """Pure-JAX reference (lax conv) for correctness checking."""
    B, n_patch, hidden = x.shape
    h = w = int(math.isqrt(n_patch))
    xi = jnp.transpose(x, (0, 2, 1)).reshape(B, hidden, h, w)
    xi = jnp.repeat(jnp.repeat(xi, scale_factor, axis=2), scale_factor, axis=3)
    pad = 1 if weight.shape[2] == 3 else 0
    y = lax.conv_general_dilated(
        xi, weight, window_strides=(1, 1), padding=[(pad, pad), (pad, pad)],
        dimension_numbers=("NCHW", "OIHW", "NCHW"))
    y = y + bias.reshape(1, -1, 1, 1)
    y = (y - running_mean.reshape(1, -1, 1, 1)) / jnp.sqrt(
        running_var.reshape(1, -1, 1, 1) + eps) * gamma.reshape(1, -1, 1, 1) \
        + beta.reshape(1, -1, 1, 1)
    return jnp.maximum(y, 0.0)


if __name__ == "__main__":
    # in_channels = hidden = 32, out_channels = 16, kernel_size = 3,
    # scale_factor = 2, n_patch = 16 -> h = w = 4 -> upsampled spatial = 8x8.
    B, n_patch, hidden = 2, 16, 32
    out_channels, kernel_size, scale_factor = 16, 3, 2

    key = jax.random.PRNGKey(0)
    kx, kw, kb = jax.random.split(key, 3)

    x = jax.random.normal(kx, (B, n_patch, hidden), dtype=jnp.float32)
    weight = 0.1 * jax.random.normal(
        kw, (out_channels, hidden, kernel_size, kernel_size), dtype=jnp.float32)
    bias = 0.1 * jax.random.normal(kb, (out_channels,), dtype=jnp.float32)

    # deterministic BatchNorm parameters / running statistics (eval mode)
    gamma = 1.0 + 0.1 * jnp.arange(out_channels, dtype=jnp.float32)
    beta = 0.05 * jnp.arange(out_channels, dtype=jnp.float32)
    running_mean = 0.01 * jnp.arange(out_channels, dtype=jnp.float32)
    running_var = 1.0 + 0.02 * jnp.arange(out_channels, dtype=jnp.float32)

    out = reconstruct_forward(x, weight, bias, gamma, beta, running_mean,
                              running_var, scale_factor=scale_factor)
    out = jax.block_until_ready(out)

    ref = reconstruct_reference(x, weight, bias, gamma, beta, running_mean,
                                running_var, scale_factor=scale_factor)
    ref = jax.block_until_ready(ref)

    assert out.shape == (B, out_channels, 8, 8), out.shape
    # bf16 MXU operands + bf16 output (f32 accumulation) vs f32 reference
    max_err = float(jnp.max(jnp.abs(out - ref)))
    assert jnp.allclose(out, ref, rtol=5e-2, atol=1.5e-1), max_err

    print("KERNEL_OK")
</pallas_src>

<mosaic_0001>
module attributes {stable_mosaic.version = 11 : i64} {
  func.func @kernel(%arg0: i32, %arg1: memref<1x3x48x32xbf16, #tpu.memory_space<vmem>>, %arg2: memref<9x32x128xbf16, #tpu.memory_space<vmem>>, %arg3: memref<1x128xf32, #tpu.memory_space<vmem>>, %arg4: memref<1x32x128xbf16, #tpu.memory_space<vmem>>, %arg5: memref<32x128xf32, #tpu.memory_space<vmem>>) attributes {dimension_semantics = [#tpu.dimension_semantics<parallel>], iteration_bounds = array<i64: 2>, scalar_prefetch = 0 : i64, scratch_operands = 1 : i64, tpu.core_type = #tpu.core_type<tc>, window_params = [{transform_indices = @transform_0, window_bounds = array<i64: 1, 3, 48, 32>}, {pipeline_mode = #tpu.pipeline_mode<synchronous>, transform_indices = @transform_1, window_bounds = array<i64: 9, 32, 128>}, {pipeline_mode = #tpu.pipeline_mode<synchronous>, transform_indices = @transform_2, window_bounds = array<i64: 1, 128>}, {transform_indices = @transform_3, window_bounds = array<i64: 1, 32, 128>}]} {
    %c0 = arith.constant 0 : index
    %c0_0 = arith.constant 0 : index
    %0 = vector.load %arg3[%c0, %c0_0] : memref<1x128xf32, #tpu.memory_space<vmem>>, vector<1x128xf32>
    %c0_1 = arith.constant 0 : index
    %c0_2 = arith.constant 0 : index
    %c0_3 = arith.constant 0 : index
    %c0_4 = arith.constant 0 : index
    %1 = vector.load %arg1[%c0_1, %c0_2, %c0_3, %c0_4] : memref<1x3x48x32xbf16, #tpu.memory_space<vmem>>, vector<1x1x32x32xbf16>
    %2 = vector.shape_cast %1 : vector<1x1x32x32xbf16> to vector<32x32xbf16>
    %c0_5 = arith.constant 0 : index
    %c0_6 = arith.constant 0 : index
    %c0_7 = arith.constant 0 : index
    %3 = vector.load %arg2[%c0_5, %c0_6, %c0_7] : memref<9x32x128xbf16, #tpu.memory_space<vmem>>, vector<1x32x128xbf16>
    %4 = vector.shape_cast %3 : vector<1x32x128xbf16> to vector<32x128xbf16>
    %cst = arith.constant dense<0.000000e+00> : vector<32x128xf32>
    %5 = tpu.matmul %2, %4, %cst {dimension_numbers = #tpu.dot_dimension_numbers<[1], [0], [0], [1], [0, 0, 1, 1], [], []>} : vector<32x32xbf16>, vector<32x128xbf16>, vector<32x128xf32> -> vector<32x128xf32>
    %c0_8 = arith.constant 0 : index
    %c0_9 = arith.constant 0 : index
    %6 = vector.load %arg5[%c0_8, %c0_9] : memref<32x128xf32, #tpu.memory_space<vmem>>, vector<32x128xf32>
    tpu.vector_store %arg5[%c0_8, %c0_9], %5 {strides = array<i32>} : memref<32x128xf32, #tpu.memory_space<vmem>>, vector<32x128xf32>,
    %c0_10 = arith.constant 0 : index
    %c1 = arith.constant 1 : index
    %c0_11 = arith.constant 0 : index
    %c0_12 = arith.constant 0 : index
    %7 = vector.load %arg1[%c0_10, %c1, %c0_11, %c0_12] : memref<1x3x48x32xbf16, #tpu.memory_space<vmem>>, vector<1x1x32x32xbf16>
    %8 = vector.shape_cast %7 : vector<1x1x32x32xbf16> to vector<32x32xbf16>
    %c1_13 = arith.constant 1 : index
    %c0_14 = arith.constant 0 : index
    %c0_15 = arith.constant 0 : index
    %9 = vector.load %arg2[%c1_13, %c0_14, %c0_15] : memref<9x32x128xbf16, #tpu.memory_space<vmem>>, vector<1x32x128xbf16>
    %10 = vector.shape_cast %9 : vector<1x32x128xbf16> to vector<32x128xbf16>
    %cst_16 = arith.constant dense<0.000000e+00> : vector<32x128xf32>
    %11 = tpu.matmul %8, %10, %cst_16 {dimension_numbers = #tpu.dot_dimension_numbers<[1], [0], [0], [1], [0, 0, 1, 1], [], []>} : vector<32x32xbf16>, vector<32x128xbf16>, vector<32x128xf32> -> vector<32x128xf32>
    %c0_17 = arith.constant 0 : index
    %c0_18 = arith.constant 0 : index
    %12 = vector.load %arg5[%c0_17, %c0_18] : memref<32x128xf32, #tpu.memory_space<vmem>>, vector<32x128xf32>
    %13 = arith.addf %12, %11 : vector<32x128xf32>
    %c0_19 = arith.constant 0 : index
    %c0_20 = arith.constant 0 : index
    %14 = vector.load %arg5[%c0_19, %c0_20] : memref<32x128xf32, #tpu.memory_space<vmem>>, vector<32x128xf32>
    tpu.vector_store %arg5[%c0_19, %c0_20], %13 {strides = array<i32>} : memref<32x128xf32, #tpu.memory_space<vmem>>, vector<32x128xf32>,
    %c0_21 = arith.constant 0 : index
    %c2 = arith.constant 2 : index
    %c0_22 = arith.constant 0 : index
    %c0_23 = arith.constant 0 : index
    %15 = vector.load %arg1[%c0_21, %c2, %c0_22, %c0_23] : memref<1x3x48x32xbf16, #tpu.memory_space<vmem>>, vector<1x1x32x32xbf16>
    %16 = vector.shape_cast %15 : vector<1x1x32x32xbf16> to vector<32x32xbf16>
    %c2_24 = arith.constant 2 : index
    %c0_25 = arith.constant 0 : index
    %c0_26 = arith.constant 0 : index
    %17 = vector.load %arg2[%c2_24, %c0_25, %c0_26] : memref<9x32x128xbf16, #tpu.memory_space<vmem>>, vector<1x32x128xbf16>
    %18 = vector.shape_cast %17 : vector<1x32x128xbf16> to vector<32x128xbf16>
    %cst_27 = arith.constant dense<0.000000e+00> : vector<32x128xf32>
    %19 = tpu.matmul %16, %18, %cst_27 {dimension_numbers = #tpu.dot_dimension_numbers<[1], [0], [0], [1], [0, 0, 1, 1], [], []>} : vector<32x32xbf16>, vector<32x128xbf16>, vector<32x128xf32> -> vector<32x128xf32>
    %c0_28 = arith.constant 0 : index
    %c0_29 = arith.constant 0 : index
    %20 = vector.load %arg5[%c0_28, %c0_29] : memref<32x128xf32, #tpu.memory_space<vmem>>, vector<32x128xf32>
    %21 = arith.addf %20, %19 : vector<32x128xf32>
    %c0_30 = arith.constant 0 : index
    %c0_31 = arith.constant 0 : index
    %22 = vector.load %arg5[%c0_30, %c0_31] : memref<32x128xf32, #tpu.memory_space<vmem>>, vector<32x128xf32>
    tpu.vector_store %arg5[%c0_30, %c0_31], %21 {strides = array<i32>} : memref<32x128xf32, #tpu.memory_space<vmem>>, vector<32x128xf32>,
    %c0_32 = arith.constant 0 : index
    %c0_33 = arith.constant 0 : index
    %c8 = arith.constant 8 : index
    %c0_34 = arith.constant 0 : index
    %23 = vector.load %arg1[%c0_32, %c0_33, %c8, %c0_34] : memref<1x3x48x32xbf16, #tpu.memory_space<vmem>>, vector<1x1x32x32xbf16>
    %24 = vector.shape_cast %23 : vector<1x1x32x32xbf16> to vector<32x32xbf16>
    %c3 = arith.constant 3 : index
    %c0_35 = arith.constant 0 : index
    %c0_36 = arith.constant 0 : index
    %25 = vector.load %arg2[%c3, %c0_35, %c0_36] : memref<9x32x128xbf16, #tpu.memory_space<vmem>>, vector<1x32x128xbf16>
    %26 = vector.shape_cast %25 : vector<1x32x128xbf16> to vector<32x128xbf16>
    %cst_37 = arith.constant dense<0.000000e+00> : vector<32x128xf32>
    %27 = tpu.matmul %24, %26, %cst_37 {dimension_numbers = #tpu.dot_dimension_numbers<[1], [0], [0], [1], [0, 0, 1, 1], [], []>} : vector<32x32xbf16>, vector<32x128xbf16>, vector<32x128xf32> -> vector<32x128xf32>
    %c0_38 = arith.constant 0 : index
    %c0_39 = arith.constant 0 : index
    %28 = vector.load %arg5[%c0_38, %c0_39] : memref<32x128xf32, #tpu.memory_space<vmem>>, vector<32x128xf32>
    %29 = arith.addf %28, %27 : vector<32x128xf32>
    %c0_40 = arith.constant 0 : index
    %c0_41 = arith.constant 0 : index
    %30 = vector.load %arg5[%c0_40, %c0_41] : memref<32x128xf32, #tpu.memory_space<vmem>>, vector<32x128xf32>
    tpu.vector_store %arg5[%c0_40, %c0_41], %29 {strides = array<i32>} : memref<32x128xf32, #tpu.memory_space<vmem>>, vector<32x128xf32>,
    %c0_42 = arith.constant 0 : index
    %c1_43 = arith.constant 1 : index
    %c8_44 = arith.constant 8 : index
    %c0_45 = arith.constant 0 : index
    %31 = vector.load %arg1[%c0_42, %c1_43, %c8_44, %c0_45] : memref<1x3x48x32xbf16, #tpu.memory_space<vmem>>, vector<1x1x32x32xbf16>
    %32 = vector.shape_cast %31 : vector<1x1x32x32xbf16> to vector<32x32xbf16>
    %c4 = arith.constant 4 : index
    %c0_46 = arith.constant 0 : index
    %c0_47 = arith.constant 0 : index
    %33 = vector.load %arg2[%c4, %c0_46, %c0_47] : memref<9x32x128xbf16, #tpu.memory_space<vmem>>, vector<1x32x128xbf16>
    %34 = vector.shape_cast %33 : vector<1x32x128xbf16> to vector<32x128xbf16>
    %cst_48 = arith.constant dense<0.000000e+00> : vector<32x128xf32>
    %35 = tpu.matmul %32, %34, %cst_48 {dimension_numbers = #tpu.dot_dimension_numbers<[1], [0], [0], [1], [0, 0, 1, 1], [], []>} : vector<32x32xbf16>, vector<32x128xbf16>, vector<32x128xf32> -> vector<32x128xf32>
    %c0_49 = arith.constant 0 : index
    %c0_50 = arith.constant 0 : index
    %36 = vector.load %arg5[%c0_49, %c0_50] : memref<32x128xf32, #tpu.memory_space<vmem>>, vector<32x128xf32>
    %37 = arith.addf %36, %35 : vector<32x128xf32>
    %c0_51 = arith.constant 0 : index
    %c0_52 = arith.constant 0 : index
    %38 = vector.load %arg5[%c0_51, %c0_52] : memref<32x128xf32, #tpu.memory_space<vmem>>, vector<32x128xf32>
    tpu.vector_store %arg5[%c0_51, %c0_52], %37 {strides = array<i32>} : memref<32x128xf32, #tpu.memory_space<vmem>>, vector<32x128xf32>,
    %c0_53 = arith.constant 0 : index
    %c2_54 = arith.constant 2 : index
    %c8_55 = arith.constant 8 : index
    %c0_56 = arith.constant 0 : index
    %39 = vector.load %arg1[%c0_53, %c2_54, %c8_55, %c0_56] : memref<1x3x48x32xbf16, #tpu.memory_space<vmem>>, vector<1x1x32x32xbf16>
    %40 = vector.shape_cast %39 : vector<1x1x32x32xbf16> to vector<32x32xbf16>
    %c5 = arith.constant 5 : index
    %c0_57 = arith.constant 0 : index
    %c0_58 = arith.constant 0 : index
    %41 = vector.load %arg2[%c5, %c0_57, %c0_58] : memref<9x32x128xbf16, #tpu.memory_space<vmem>>, vector<1x32x128xbf16>
    %42 = vector.shape_cast %41 : vector<1x32x128xbf16> to vector<32x128xbf16>
    %cst_59 = arith.constant dense<0.000000e+00> : vector<32x128xf32>
    %43 = tpu.matmul %40, %42, %cst_59 {dimension_numbers = #tpu.dot_dimension_numbers<[1], [0], [0], [1], [0, 0, 1, 1], [], []>} : vector<32x32xbf16>, vector<32x128xbf16>, vector<32x128xf32> -> vector<32x128xf32>
    %c0_60 = arith.constant 0 : index
    %c0_61 = arith.constant 0 : index
    %44 = vector.load %arg5[%c0_60, %c0_61] : memref<32x128xf32, #tpu.memory_space<vmem>>, vector<32x128xf32>
    %45 = arith.addf %44, %43 : vector<32x128xf32>
    %c0_62 = arith.constant 0 : index
    %c0_63 = arith.constant 0 : index
    %46 = vector.load %arg5[%c0_62, %c0_63] : memref<32x128xf32, #tpu.memory_space<vmem>>, vector<32x128xf32>
    tpu.vector_store %arg5[%c0_62, %c0_63], %45 {strides = array<i32>} : memref<32x128xf32, #tpu.memory_space<vmem>>, vector<32x128xf32>,
    %c0_64 = arith.constant 0 : index
    %c0_65 = arith.constant 0 : index
    %c16 = arith.constant 16 : index
    %c0_66 = arith.constant 0 : index
    %47 = vector.load %arg1[%c0_64, %c0_65, %c16, %c0_66] : memref<1x3x48x32xbf16, #tpu.memory_space<vmem>>, vector<1x1x32x32xbf16>
    %48 = vector.shape_cast %47 : vector<1x1x32x32xbf16> to vector<32x32xbf16>
    %c6 = arith.constant 6 : index
    %c0_67 = arith.constant 0 : index
    %c0_68 = arith.constant 0 : index
    %49 = vector.load %arg2[%c6, %c0_67, %c0_68] : memref<9x32x128xbf16, #tpu.memory_space<vmem>>, vector<1x32x128xbf16>
    %50 = vector.shape_cast %49 : vector<1x32x128xbf16> to vector<32x128xbf16>
    %cst_69 = arith.constant dense<0.000000e+00> : vector<32x128xf32>
    %51 = tpu.matmul %48, %50, %cst_69 {dimension_numbers = #tpu.dot_dimension_numbers<[1], [0], [0], [1], [0, 0, 1, 1], [], []>} : vector<32x32xbf16>, vector<32x128xbf16>, vector<32x128xf32> -> vector<32x128xf32>
    %c0_70 = arith.constant 0 : index
    %c0_71 = arith.constant 0 : index
    %52 = vector.load %arg5[%c0_70, %c0_71] : memref<32x128xf32, #tpu.memory_space<vmem>>, vector<32x128xf32>
    %53 = arith.addf %52, %51 : vector<32x128xf32>
    %c0_72 = arith.constant 0 : index
    %c0_73 = arith.constant 0 : index
    %54 = vector.load %arg5[%c0_72, %c0_73] : memref<32x128xf32, #tpu.memory_space<vmem>>, vector<32x128xf32>
    tpu.vector_store %arg5[%c0_72, %c0_73], %53 {strides = array<i32>} : memref<32x128xf32, #tpu.memory_space<vmem>>, vector<32x128xf32>,
    %c0_74 = arith.constant 0 : index
    %c1_75 = arith.constant 1 : index
    %c16_76 = arith.constant 16 : index
    %c0_77 = arith.constant 0 : index
    %55 = vector.load %arg1[%c0_74, %c1_75, %c16_76, %c0_77] : memref<1x3x48x32xbf16, #tpu.memory_space<vmem>>, vector<1x1x32x32xbf16>
    %56 = vector.shape_cast %55 : vector<1x1x32x32xbf16> to vector<32x32xbf16>
    %c7 = arith.constant 7 : index
    %c0_78 = arith.constant 0 : index
    %c0_79 = arith.constant 0 : index
    %57 = vector.load %arg2[%c7, %c0_78, %c0_79] : memref<9x32x128xbf16, #tpu.memory_space<vmem>>, vector<1x32x128xbf16>
    %58 = vector.shape_cast %57 : vector<1x32x128xbf16> to vector<32x128xbf16>
    %cst_80 = arith.constant dense<0.000000e+00> : vector<32x128xf32>
    %59 = tpu.matmul %56, %58, %cst_80 {dimension_numbers = #tpu.dot_dimension_numbers<[1], [0], [0], [1], [0, 0, 1, 1], [], []>} : vector<32x32xbf16>, vector<32x128xbf16>, vector<32x128xf32> -> vector<32x128xf32>
    %c0_81 = arith.constant 0 : index
    %c0_82 = arith.constant 0 : index
    %60 = vector.load %arg5[%c0_81, %c0_82] : memref<32x128xf32, #tpu.memory_space<vmem>>, vector<32x128xf32>
    %61 = arith.addf %60, %59 : vector<32x128xf32>
    %c0_83 = arith.constant 0 : index
    %c0_84 = arith.constant 0 : index
    %62 = vector.load %arg5[%c0_83, %c0_84] : memref<32x128xf32, #tpu.memory_space<vmem>>, vector<32x128xf32>
    tpu.vector_store %arg5[%c0_83, %c0_84], %61 {strides = array<i32>} : memref<32x128xf32, #tpu.memory_space<vmem>>, vector<32x128xf32>,
    %c0_85 = arith.constant 0 : index
    %c2_86 = arith.constant 2 : index
    %c16_87 = arith.constant 16 : index
    %c0_88 = arith.constant 0 : index
    %63 = vector.load %arg1[%c0_85, %c2_86, %c16_87, %c0_88] : memref<1x3x48x32xbf16, #tpu.memory_space<vmem>>, vector<1x1x32x32xbf16>
    %64 = vector.shape_cast %63 : vector<1x1x32x32xbf16> to vector<32x32xbf16>
    %c8_89 = arith.constant 8 : index
    %c0_90 = arith.constant 0 : index
    %c0_91 = arith.constant 0 : index
    %65 = vector.load %arg2[%c8_89, %c0_90, %c0_91] : memref<9x32x128xbf16, #tpu.memory_space<vmem>>, vector<1x32x128xbf16>
    %66 = vector.shape_cast %65 : vector<1x32x128xbf16> to vector<32x128xbf16>
    %cst_92 = arith.constant dense<0.000000e+00> : vector<32x128xf32>
    %67 = tpu.matmul %64, %66, %cst_92 {dimension_numbers = #tpu.dot_dimension_numbers<[1], [0], [0], [1], [0, 0, 1, 1], [], []>} : vector<32x32xbf16>, vector<32x128xbf16>, vector<32x128xf32> -> vector<32x128xf32>
    %c0_93 = arith.constant 0 : index
    %c0_94 = arith.constant 0 : index
    %68 = vector.load %arg5[%c0_93, %c0_94] : memref<32x128xf32, #tpu.memory_space<vmem>>, vector<32x128xf32>
    %69 = arith.addf %68, %67 : vector<32x128xf32>
    %c0_95 = arith.constant 0 : index
    %c0_96 = arith.constant 0 : index
    %70 = vector.load %arg5[%c0_95, %c0_96] : memref<32x128xf32, #tpu.memory_space<vmem>>, vector<32x128xf32>
    tpu.vector_store %arg5[%c0_95, %c0_96], %69 {strides = array<i32>} : memref<32x128xf32, #tpu.memory_space<vmem>>, vector<32x128xf32>,
    %c0_97 = arith.constant 0 : index
    %c0_98 = arith.constant 0 : index
    %71 = vector.load %arg5[%c0_97, %c0_98] : memref<32x128xf32, #tpu.memory_space<vmem>>, vector<32x128xf32>
    %72 = vector.broadcast %0 : vector<1x128xf32> to vector<32x128xf32>
    %73 = arith.addf %71, %72 : vector<32x128xf32>
    %cst_99 = arith.constant 0.000000e+00 : f32
    %74 = vector.broadcast %cst_99 : f32 to vector<32x128xf32>
    %75 = arith.maximumf %73, %74 : vector<32x128xf32>
    %76 = arith.truncf %75 : vector<32x128xf32> to vector<32x128xbf16>
    %c0_100 = arith.constant 0 : index
    %c0_101 = arith.constant 0 : index
    %c0_102 = arith.constant 0 : index
    %77 = vector.load %arg4[%c0_100, %c0_101, %c0_102] : memref<1x32x128xbf16, #tpu.memory_space<vmem>>, vector<1x32x128xbf16>
    %78 = vector.shape_cast %77 : vector<1x32x128xbf16> to vector<32x128xbf16>
    %79 = vector.shape_cast %76 : vector<32x128xbf16> to vector<1x32x128xbf16>
    tpu.vector_store %arg4[%c0_100, %c0_101, %c0_102], %79 {strides = array<i32>} : memref<1x32x128xbf16, #tpu.memory_space<vmem>>, vector<1x32x128xbf16>,
    return
  }
  func.func @transform_0(%arg0: i32) -> (i32, i32, i32, i32) {
    %c0_i32 = arith.constant 0 : i32
    %c0_i32_0 = arith.constant 0 : i32
    %c0_i32_1 = arith.constant 0 : i32
    %c0_i32_2 = arith.constant 0 : i32
    return %arg0, %c0_i32, %c0_i32_0, %c0_i32_1 : i32, i32, i32, i32
  }
  func.func @transform_1(%arg0: i32) -> (i32, i32, i32) {
    %c0_i32 = arith.constant 0 : i32
    %c0_i32_0 = arith.constant 0 : i32
    %c0_i32_1 = arith.constant 0 : i32
    %c0_i32_2 = arith.constant 0 : i32
    return %c0_i32, %c0_i32_0, %c0_i32_1 : i32, i32, i32
  }
  func.func @transform_2(%arg0: i32) -> (i32, i32) {
    %c0_i32 = arith.constant 0 : i32
    %c0_i32_0 = arith.constant 0 : i32
    %c0_i32_1 = arith.constant 0 : i32
    return %c0_i32, %c0_i32_0 : i32, i32
  }
  func.func @transform_3(%arg0: i32) -> (i32, i32, i32) {
    %c0_i32 = arith.constant 0 : i32
    %c0_i32_0 = arith.constant 0 : i32
    %c0_i32_1 = arith.constant 0 : i32
    return %arg0, %c0_i32, %c0_i32_0 : i32, i32, i32
  }
}

</mosaic_0001>

<llo_original>
// kernel: tpu_custom_call.1
$region0: #{tpu_custom_call.1}
  #allocation0 [shape = 'u32[]', space=smem, size = 0x4, offset = 0x4, fixed_abs, tag = 'smem constant byte address 0x4 - core index']
  #allocation1 [shape = 'u32[144,128]{1,0:T(1,128)}', space=vmem, size = 0x12000, scoped, tag = 'internal scratch']
  #allocation2 [shape = 'f32[32,128]{1,0:T(8,128)}', space=vmem, size = 0x4000, scoped, tag = 'scratch operand']
  %s0 = inlined_call_operand.vmem [shape: bf16[2,3,48,32], index: 0, kind: input, shape index: {}]
  %s1 = inlined_call_operand.vmem [shape: bf16[9,32,128], index: 1, kind: input, shape index: {}]
  %s2 = inlined_call_operand.vmem [shape: f32[1,128], index: 2, kind: input, shape index: {}]
  %s3 = inlined_call_operand.hbm [shape: bf16[2,32,128], index: 3, kind: output, shape index: {}]
  %s4 = sld [smem:[#allocation0]]
  $region45: #{tpu_custom_call.1} parent=0
    _
  %s6 = ssub.s32 1, %s4
  %s7 = scalar_select 0, %s6, %s4
  $region1: #{tpu_custom_call.1} parent=0
    #allocation3 [shape = 'u8[16384]{0}', space=vmem, size = 0x4000, scoped, tag = 'output window, operand 0']
    #allocation4 [shape = 's32[2]{0}', space=sflag, size = 0x8, scoped, tag = 'scoped memory for tpu_custom_call.1']
    %8 = vsyncpa [#allocation4], 0
    %s9 = scalar_lea.sflag [#allocation4], 1
    %10 = vsyncpa %s9, 0
    loop: start=0, step=1, limit=4
    $region2: #{tpu_custom_call.1} parent=1 // loop_pre_header
      _
    $region3: #{tpu_custom_call.1} parent=1 // loop_header
      %s12 = sphi 0, %s16
      %p13 = scmp.ge.s32.totalorder %s12, 4
      %s22 = sphi 0, %s24
      %s25 = sphi 0, %s22
      %s26 = sphi 0, %s25
      %s42 = sphi 0, %s26
      %s46 = sphi 0, %s46
      %s48 = sphi 0, %s46
      %s49 = sphi 0, %s48
      %s63 = sphi 0, %s49
      %s67 = sphi 0, %s67
      %s69 = sphi 0, %s67
      %s70 = sphi 0, %s69
      %s84 = sphi 0, %s70
      %s90 = sphi 0, %s92
      %s93 = sphi 0, %s90
      %s94 = sphi 0, %s93
      %s110 = sphi 0, %s94
    $region4: #{tpu_custom_call.1} parent=1 // loop_header_branch
      %15 = sbr.rel (%p13) target = $region8
    $region5: #{tpu_custom_call.1} parent=1 // loop_body
      %s17 = ssub.s32 %s12, 1
      %s18 = ssub.s32 %s12, 2
      %s19 = sadd.s32 %s12, 1
      %s20 = ssub.s32 %s12, %s19
      %p21 = scmp.eq.s32.totalorder %s20, 0
      %s23 = sadd.s32 %s22, 1
      %s24 = scalar_select %p21, %s22, %s23
      %p27 = pneg %p21
      %p28 = scmp.eq.s32.totalorder %s12, 1
      %p29 = por %p27, %p28
      %p30 = scmp.ne.s32.totalorder %s22, %s25
      %p31 = scmp.eq.s32.totalorder %s12, 0
      %p32 = por %p30, %p31
      %p33 = scmp.ne.s32.totalorder %s22, %s25
      %p34 = scmp.eq.s32.totalorder %s17, 1
      %p35 = por %p33, %p34
      %p36 = scmp.ne.s32.totalorder %s25, %s26
      %p37 = scmp.eq.s32.totalorder %s17, 0
      %p38 = por %p36, %p37
      %p39 = scmp.ne.s32.totalorder %s25, %s26
      %p40 = scmp.eq.s32.totalorder %s18, 1
      %p41 = por %p39, %p40
      %p43 = scmp.ne.s32.totalorder %s26, %s42
      %p44 = scmp.eq.s32.totalorder %s18, 0
      %p45 = por %p43, %p44
      %s47 = sadd.s32 %s46, 1
      %p50 = scmp.eq.s32.totalorder %s12, 1
      %p51 = scmp.ne.s32.totalorder %s46, %s48
      %p52 = scmp.eq.s32.totalorder %s12, 0
      %p53 = por %p51, %p52
      %p54 = scmp.ne.s32.totalorder %s46, %s48
      %p55 = scmp.eq.s32.totalorder %s17, 1
      %p56 = por %p54, %p55
      %p57 = scmp.ne.s32.totalorder %s48, %s49
      %p58 = scmp.eq.s32.totalorder %s17, 0
      %p59 = por %p57, %p58
      %p60 = scmp.ne.s32.totalorder %s48, %s49
      %p61 = scmp.eq.s32.totalorder %s18, 1
      %p62 = por %p60, %p61
      %p64 = scmp.ne.s32.totalorder %s49, %s63
      %p65 = scmp.eq.s32.totalorder %s18, 0
      %p66 = por %p64, %p65
      %s68 = sadd.s32 %s67, 1
      %p71 = scmp.eq.s32.totalorder %s12, 1
      %p72 = scmp.ne.s32.totalorder %s67, %s69
      %p73 = scmp.eq.s32.totalorder %s12, 0
      %p74 = por %p72, %p73
      %p75 = scmp.ne.s32.totalorder %s67, %s69
      %p76 = scmp.eq.s32.totalorder %s17, 1
      %p77 = por %p75, %p76
      %p78 = scmp.ne.s32.totalorder %s69, %s70
      %p79 = scmp.eq.s32.totalorder %s17, 0
      %p80 = por %p78, %p79
      %p81 = scmp.ne.s32.totalorder %s69, %s70
      %p82 = scmp.eq.s32.totalorder %s18, 1
      %p83 = por %p81, %p82
      %p85 = scmp.ne.s32.totalorder %s70, %s84
      %p86 = scmp.eq.s32.totalorder %s18, 0
      %p87 = por %p85, %p86
      %s88 = ssub.s32 %s12, %s19
      %p89 = scmp.eq.s32.totalorder %s88, 0
      %s91 = sadd.s32 %s90, 1
      %s92 = scalar_select %p89, %s90, %s91
      %p95 = pneg %p89
      %p96 = scmp.eq.s32.totalorder %s12, 1
      %p97 = por %p95, %p96
      %p98 = scmp.ne.s32.totalorder %s90, %s93
      %p99 = scmp.eq.s32.totalorder %s12, 0
      %p100 = por %p98, %p99
      %p101 = scmp.ne.s32.totalorder %s90, %s93
      %p102 = scmp.eq.s32.totalorder %s17, 1
      %p103 = por %p101, %p102
      %p104 = scmp.ne.s32.totalorder %s93, %s94
      %p105 = scmp.eq.s32.totalorder %s17, 0
      %p106 = por %p104, %p105
      %p107 = scmp.ne.s32.totalorder %s93, %s94
      %p108 = scmp.eq.s32.totalorder %s18, 1
      %p109 = por %p107, %p108
      %p111 = scmp.ne.s32.totalorder %s94, %s110
      %p112 = scmp.eq.s32.totalorder %s18, 0
      %p113 = por %p111, %p112
      %p114 = scmp.le.s32.totalorder 1, %s12
      %p115 = scmp.lt.s32.totalorder %s12, 3
      %p116 = pnand %p114, %p115
      %p117 = pneg %p116
      // Predicated region
      $region9: #{tpu_custom_call.1} parent=5 // pred_check
        _
      $region10: #{tpu_custom_call.1} parent=5 // pred_check_branch
        %119 = sbr.rel (%p116) target = $region12
      $region11: #{tpu_custom_call.1} parent=5 // pred_region
        %s120 = ssub.s32 %s12, 1
        // Predicated region
        $region13: #{tpu_custom_call.1} parent=11 // pred_check
          %p121 = pneg %p59
        $region14: #{tpu_custom_call.1} parent=11 // pred_check_branch
          %123 = sbr.rel (%p121) target = $region16
        $region15: #{tpu_custom_call.1} parent=11 // pred_region
          _
        $region16: #{tpu_custom_call.1} parent=11 // pred_fallthru
          _
        // Predicated region
        $region17: #{tpu_custom_call.1} parent=11 // pred_check
          %p124 = pneg %p80
        $region18: #{tpu_custom_call.1} parent=11 // pred_check_branch
          %126 = sbr.rel (%p124) target = $region20
        $region19: #{tpu_custom_call.1} parent=11 // pred_region
          _
        $region20: #{tpu_custom_call.1} parent=11 // pred_fallthru
          _
      $region12: #{tpu_custom_call.1} parent=5 // pred_fallthru
        _
      %p127 = scmp.lt.s32.totalorder %s12, 2
      // Predicated region
      $region21: #{tpu_custom_call.1} parent=5 // pred_check
        %p128 = pneg %p127
      $region22: #{tpu_custom_call.1} parent=5 // pred_check_branch
        %130 = sbr.rel (%p128) target = $region24
      $region23: #{tpu_custom_call.1} parent=5 // pred_region
        // Predicated region
        $region25: #{tpu_custom_call.1} parent=23 // pred_check
          %p131 = pneg %p32
        $region26: #{tpu_custom_call.1} parent=23 // pred_check_branch
          %133 = sbr.rel (%p131) target = $region28
        $region27: #{tpu_custom_call.1} parent=23 // pred_region
          %p134 = scmp.lt.s32.totalorder %s12, 1
          %s135 = scalar_select %p134, %s12, 1
          %s136 = smul.addr %s135, 18
          %s137 = smul.addr %s136, 4
          %s138 = scalar_lea.vmem %s0, %s137
        $region28: #{tpu_custom_call.1} parent=23 // pred_fallthru
          _
      $region24: #{tpu_custom_call.1} parent=5 // pred_fallthru
        _
      %p139 = scmp.le.s32.totalorder 1, %s12
      %p140 = scmp.lt.s32.totalorder %s12, 3
      %p141 = pnand %p139, %p140
      %p142 = pneg %p141
      // Predicated region
      $region29: #{tpu_custom_call.1} parent=5 // pred_check
        _
      $region30: #{tpu_custom_call.1} parent=5 // pred_check_branch
        %144 = sbr.rel (%p141) target = $region32
      $region31: #{tpu_custom_call.1} parent=5 // pred_region
        %s145 = ssub.s32 %s12, 1
        %p146 = scmp.lt.s32.totalorder %s17, 1
        %s147 = scalar_select %p146, %s17, 1
        %s148 = smul.addr %s147, 18
        %s149 = smul.addr %s148, 4
        %s150 = scalar_lea.vmem %s0, %s149
        %p151 = pneg %p38
        %p152 = pneg %p35
        %p153 = pneg %p59
        %p154 = pneg %p56
        %p155 = pneg %p80
        %p156 = pneg %p77
        %p157 = pneg %p106
        %p158 = pneg %p103
        %s159 = sand.u32 %s93, 1
        %s160 = scalar_lea.sflag [#allocation4], %s159
        %s161 = sand.u32 %s93, 1
        %s162 = smul.addr %s161, 16
        %s163 = scalar_lea.vmem [#allocation3], %s162
        %p164 = scmp.lt.s32.totalorder %s17, 1
        %s165 = scalar_select %p164, %s17, 1
        %s166 = smul.addr %s165, 18
        %s167 = smul.addr %s166, 4
        %s168 = scalar_lea.vmem %s0, %s167
        %v170 = vld [vmem:[%s2] sm:$0x1]
        %v171 = vld [vmem:[%s168] sm:$0xf]
        %v172 = vld [vmem:[%s168 + $0x4] sm:$0xf]
        %v173 = vld [vmem:[%s168 + $0x8] sm:$0xf]
        %v174 = vld [vmem:[%s168 + $0xc] sm:$0xf]
        %v175 = vld [vmem:[%s1] sm:$0xf]
        %v176 = vld [vmem:[%s1 + $0x4] sm:$0xf]
        %v177 = vld [vmem:[%s1 + $0x8] sm:$0xf]
        %v178 = vld [vmem:[%s1 + $0xc] sm:$0xf]
        %v183 = vunpack.c.l.b16 %v171
        %v184 = vunpack.c.l.b16 %v172
        %v185 = vunpack.c.l.b16 %v173
        %v186 = vunpack.c.l.b16 %v174
        %v187 = vpack.c.b16 %v184, %v183
        %v188 = vpack.c.b16 %v186, %v185
        %v193 = vunpack.c.l.b16 %v175
        %v194 = vunpack.c.l.b16 %v176
        %v195 = vunpack.c.l.b16 %v177
        %v196 = vunpack.c.l.b16 %v178
        %v197 = vpack.c.b16 %v194, %v193
        %v198 = vpack.c.b16 %v196, %v195
        %vm201 = vcmask 261120
        %v203 = vsel %vm201, %v187, 0
        %v206 = vsel %vm201, %v188, 0
        %208 = vmatprep.subr.bf16.mxu0 0
        %209 = vmatpush1.bf16.msra.mxu0 %v197
        %210 = vmatprep.subr.bf16.mxu0 0
        %211 = vmatpush1.bf16.msra.mxu0 %v198
        %212 = vmatprep.subr.bf16.mxu0 0
        %213 = vmatpush1.bf16.msra.mxu0 0
        %214 = vmatprep.subr.bf16.mxu0 0
        %215 = vmatpush1.bf16.msra.mxu0 0
        %216 = vmatprep.subr.bf16.mxu0 0
        %217 = vmatpush1.bf16.msra.mxu0 0
        %218 = vmatprep.subr.bf16.mxu0 0
        %219 = vmatpush1.bf16.msra.mxu0 0
        %220 = vmatprep.subr.bf16.mxu0 0
        %221 = vmatpush1.bf16.msra.mxu0 0
        %222 = vmatprep.subr.bf16.mxu0 0
        %223 = vmatpush1.bf16.msra.mxu0 0
        %224 = vmatprep.subr.bf16.mxu0 0
        %225 = vmatpush1.bf16.msra.mxu0 0
        %226 = vmatprep.subr.bf16.mxu0 0
        %227 = vmatpush1.bf16.msra.mxu0 0
        %228 = vmatprep.subr.bf16.mxu0 0
        %229 = vmatpush1.bf16.msra.mxu0 0
        %230 = vmatprep.subr.bf16.mxu0 0
        %231 = vmatpush1.bf16.msra.mxu0 0
        %232 = vmatprep.subr.bf16.mxu0 0
        %233 = vmatpush1.bf16.msra.mxu0 0
        %234 = vmatprep.subr.bf16.mxu0 0
        %235 = vmatpush1.bf16.msra.mxu0 0
        %236 = vmatprep.subr.bf16.mxu0 0
        %237 = vmatpush1.bf16.msra.mxu0 0
        %238 = vmatprep.subr.bf16.mxu0 0
        %239 = vmatpush1.bf16.msra.mxu0 0
        %240 = vmatprep.mubr.bf16.mxu0 0
        %241 = vmatmul.mubr.bf16.gmra.mrb[0].mxu0 %v203
        %v242 = vpop.f32.mrb[0].mxu0
        %v243 = vadd.f32 0.0, %v242
        %v244 = vpop.f32.mrb[0].mxu0
        %v245 = vpop.f32.mrb[0].mxu0
        %v246 = vadd.f32 0.0, %v245
        %v247 = vpop.f32.mrb[0].mxu0
        %248 = vmatprep.mubr.bf16.mxu0 0
        %249 = vmatmul.mubr.bf16.gmra.mrb[0].mxu0 %v206
        %v250 = vpop.f32.mrb[0].mxu0
        %v251 = vadd.f32 0.0, %v250
        %v252 = vpop.f32.mrb[0].mxu0
        %v253 = vpop.f32.mrb[0].mxu0
        %v254 = vadd.f32 0.0, %v253
        %v255 = vpop.f32.mrb[0].mxu0
        %256 = vdwg.mxu0
        %257 = vst [vmem:[#allocation2] sm:$0xff] %v243
        %258 = vst [vmem:[#allocation2 + $0x8] sm:$0xff] %v246
        %259 = vst [vmem:[#allocation2 + $0x10] sm:$0xff] %v251
        %260 = vst [vmem:[#allocation2 + $0x18] sm:$0xff] %v254
        %s261 = scalar_lea.vmem %s168, 24
        %v262 = vld [vmem:[%s261] sm:$0xf]
        %v263 = vld [vmem:[%s261 + $0x4] sm:$0xf]
        %v264 = vld [vmem:[%s261 + $0x8] sm:$0xf]
        %v265 = vld [vmem:[%s261 + $0xc] sm:$0xf]
        %s266 = scalar_lea.vmem %s1, 16
        %v267 = vld [vmem:[%s266] sm:$0xf]
        %v268 = vld [vmem:[%s266 + $0x4] sm:$0xf]
        %v269 = vld [vmem:[%s266 + $0x8] sm:$0xf]
        %v270 = vld [vmem:[%s266 + $0xc] sm:$0xf]
        %v275 = vunpack.c.l.b16 %v262
        %v276 = vunpack.c.l.b16 %v263
        %v277 = vunpack.c.l.b16 %v264
        %v278 = vunpack.c.l.b16 %v265
        %v279 = vpack.c.b16 %v276, %v275
        %v280 = vpack.c.b16 %v278, %v277
        %v285 = vunpack.c.l.b16 %v267
        %v286 = vunpack.c.l.b16 %v268
        %v287 = vunpack.c.l.b16 %v269
        %v288 = vunpack.c.l.b16 %v270
        %v289 = vpack.c.b16 %v286, %v285
        %v290 = vpack.c.b16 %v288, %v287
        %v294 = vsel %vm201, %v279, 0
        %v297 = vsel %vm201, %v280, 0
        %299 = vmatprep.subr.bf16.mxu0 0
        %300 = vmatpush1.bf16.msra.mxu0 %v289
        %301 = vmatprep.subr.bf16.mxu0 0
        %302 = vmatpush1.bf16.msra.mxu0 %v290
        %303 = vmatprep.subr.bf16.mxu0 0
        %304 = vmatpush1.bf16.msra.mxu0 0
        %305 = vmatprep.subr.bf16.mxu0 0
        %306 = vmatpush1.bf16.msra.mxu0 0
        %307 = vmatprep.subr.bf16.mxu0 0
        %308 = vmatpush1.bf16.msra.mxu0 0
        %309 = vmatprep.subr.bf16.mxu0 0
        %310 = vmatpush1.bf16.msra.mxu0 0
        %311 = vmatprep.subr.bf16.mxu0 0
        %312 = vmatpush1.bf16.msra.mxu0 0
        %313 = vmatprep.subr.bf16.mxu0 0
        %314 = vmatpush1.bf16.msra.mxu0 0
        %315 = vmatprep.subr.bf16.mxu0 0
        %316 = vmatpush1.bf16.msra.mxu0 0
        %317 = vmatprep.subr.bf16.mxu0 0
        %318 = vmatpush1.bf16.msra.mxu0 0
        %319 = vmatprep.subr.bf16.mxu0 0
        %320 = vmatpush1.bf16.msra.mxu0 0
        %321 = vmatprep.subr.bf16.mxu0 0
        %322 = vmatpush1.bf16.msra.mxu0 0
        %323 = vmatprep.subr.bf16.mxu0 0
        %324 = vmatpush1.bf16.msra.mxu0 0
        %325 = vmatprep.subr.bf16.mxu0 0
        %326 = vmatpush1.bf16.msra.mxu0 0
        %327 = vmatprep.subr.bf16.mxu0 0
        %328 = vmatpush1.bf16.msra.mxu0 0
        %329 = vmatprep.subr.bf16.mxu0 0
        %330 = vmatpush1.bf16.msra.mxu0 0
        %331 = vmatprep.mubr.bf16.mxu0 0
        %332 = vmatmul.mubr.bf16.gmra.mrb[0].mxu0 %v294
        %v333 = vpop.f32.mrb[0].mxu0
        %v334 = vadd.f32 0.0, %v333
        %v335 = vpop.f32.mrb[0].mxu0
        %v336 = vpop.f32.mrb[0].mxu0
        %v337 = vadd.f32 0.0, %v336
        %v338 = vpop.f32.mrb[0].mxu0
        %339 = vmatprep.mubr.bf16.mxu0 0
        %340 = vmatmul.mubr.bf16.gmra.mrb[0].mxu0 %v297
        %v341 = vpop.f32.mrb[0].mxu0
        %v342 = vadd.f32 0.0, %v341
        %v343 = vpop.f32.mrb[0].mxu0
        %v344 = vpop.f32.mrb[0].mxu0
        %v345 = vadd.f32 0.0, %v344
        %v346 = vpop.f32.mrb[0].mxu0
        %347 = vdwg.mxu0
        %v348 = vld [vmem:[#allocation2] sm:$0xff]
        %v349 = vld [vmem:[#allocation2 + $0x8] sm:$0xff]
        %v350 = vld [vmem:[#allocation2 + $0x10] sm:$0xff]
        %v351 = vld [vmem:[#allocation2 + $0x18] sm:$0xff]
        %v352 = vadd.f32 %v348, %v334
        %v353 = vadd.f32 %v349, %v337
        %v354 = vadd.f32 %v350, %v342
        %v355 = vadd.f32 %v351, %v345
        %356 = vst [vmem:[#allocation2] sm:$0xff] %v352
        %357 = vst [vmem:[#allocation2 + $0x8] sm:$0xff] %v353
        %358 = vst [vmem:[#allocation2 + $0x10] sm:$0xff] %v354
        %359 = vst [vmem:[#allocation2 + $0x18] sm:$0xff] %v355
        %s360 = scalar_lea.vmem %s168, 48
        %v361 = vld [vmem:[%s360] sm:$0xf]
        %v362 = vld [vmem:[%s360 + $0x4] sm:$0xf]
        %v363 = vld [vmem:[%s360 + $0x8] sm:$0xf]
        %v364 = vld [vmem:[%s360 + $0xc] sm:$0xf]
        %s365 = scalar_lea.vmem %s1, 32
        %v366 = vld [vmem:[%s365] sm:$0xf]
        %v367 = vld [vmem:[%s365 + $0x4] sm:$0xf]
        %v368 = vld [vmem:[%s365 + $0x8] sm:$0xf]
        %v369 = vld [vmem:[%s365 + $0xc] sm:$0xf]
        %v374 = vunpack.c.l.b16 %v361
        %v375 = vunpack.c.l.b16 %v362
        %v376 = vunpack.c.l.b16 %v363
        %v377 = vunpack.c.l.b16 %v364
        %v378 = vpack.c.b16 %v375, %v374
        %v379 = vpack.c.b16 %v377, %v376
        %v384 = vunpack.c.l.b16 %v366
        %v385 = vunpack.c.l.b16 %v367
        %v386 = vunpack.c.l.b16 %v368
        %v387 = vunpack.c.l.b16 %v369
        %v388 = vpack.c.b16 %v385, %v384
        %v389 = vpack.c.b16 %v387, %v386
        %v393 = vsel %vm201, %v378, 0
        %v396 = vsel %vm201, %v379, 0
        %398 = vmatprep.subr.bf16.mxu0 0
        %399 = vmatpush1.bf16.msra.mxu0 %v388
        %400 = vmatprep.subr.bf16.mxu0 0
        %401 = vmatpush1.bf16.msra.mxu0 %v389
        %402 = vmatprep.subr.bf16.mxu0 0
        %403 = vmatpush1.bf16.msra.mxu0 0
        %404 = vmatprep.subr.bf16.mxu0 0
        %405 = vmatpush1.bf16.msra.mxu0 0
        %406 = vmatprep.subr.bf16.mxu0 0
        %407 = vmatpush1.bf16.msra.mxu0 0
        %408 = vmatprep.subr.bf16.mxu0 0
        %409 = vmatpush1.bf16.msra.mxu0 0
        %410 = vmatprep.subr.bf16.mxu0 0
        %411 = vmatpush1.bf16.msra.mxu0 0
        %412 = vmatprep.subr.bf16.mxu0 0
        %413 = vmatpush1.bf16.msra.mxu0 0
        %414 = vmatprep.subr.bf16.mxu0 0
        %415 = vmatpush1.bf16.msra.mxu0 0
        %416 = vmatprep.subr.bf16.mxu0 0
        %417 = vmatpush1.bf16.msra.mxu0 0
        %418 = vmatprep.subr.bf16.mxu0 0
        %419 = vmatpush1.bf16.msra.mxu0 0
        %420 = vmatprep.subr.bf16.mxu0 0
        %421 = vmatpush1.bf16.msra.mxu0 0
        %422 = vmatprep.subr.bf16.mxu0 0
        %423 = vmatpush1.bf16.msra.mxu0 0
        %424 = vmatprep.subr.bf16.mxu0 0
        %425 = vmatpush1.bf16.msra.mxu0 0
        %426 = vmatprep.subr.bf16.mxu0 0
        %427 = vmatpush1.bf16.msra.mxu0 0
        %428 = vmatprep.subr.bf16.mxu0 0
        %429 = vmatpush1.bf16.msra.mxu0 0
        %430 = vmatprep.mubr.bf16.mxu0 0
        %431 = vmatmul.mubr.bf16.gmra.mrb[0].mxu0 %v393
        %v432 = vpop.f32.mrb[0].mxu0
        %v433 = vadd.f32 0.0, %v432
        %v434 = vpop.f32.mrb[0].mxu0
        %v435 = vpop.f32.mrb[0].mxu0
        %v436 = vadd.f32 0.0, %v435
        %v437 = vpop.f32.mrb[0].mxu0
        %438 = vmatprep.mubr.bf16.mxu0 0
        %439 = vmatmul.mubr.bf16.gmra.mrb[0].mxu0 %v396
        %v440 = vpop.f32.mrb[0].mxu0
        %v441 = vadd.f32 0.0, %v440
        %v442 = vpop.f32.mrb[0].mxu0
        %v443 = vpop.f32.mrb[0].mxu0
        %v444 = vadd.f32 0.0, %v443
        %v445 = vpop.f32.mrb[0].mxu0
        %446 = vdwg.mxu0
        %v447 = vld [vmem:[#allocation2] sm:$0xff]
        %v448 = vld [vmem:[#allocation2 + $0x8] sm:$0xff]
        %v449 = vld [vmem:[#allocation2 + $0x10] sm:$0xff]
        %v450 = vld [vmem:[#allocation2 + $0x18] sm:$0xff]
        %v451 = vadd.f32 %v447, %v433
        %v452 = vadd.f32 %v448, %v436
        %v453 = vadd.f32 %v449, %v441
        %v454 = vadd.f32 %v450, %v444
        %455 = vst [vmem:[#allocation2] sm:$0xff] %v451
        %456 = vst [vmem:[#allocation2 + $0x8] sm:$0xff] %v452
        %457 = vst [vmem:[#allocation2 + $0x10] sm:$0xff] %v453
        %458 = vst [vmem:[#allocation2 + $0x18] sm:$0xff] %v454
        %v459 = vld [vmem:[%s168 + $0x4] sm:$0xf]
        %v460 = vld [vmem:[%s168 + $0x8] sm:$0xf]
        %v461 = vld [vmem:[%s168 + $0xc] sm:$0xf]
        %v462 = vld [vmem:[%s168 + $0x10] sm:$0xf]
        %s463 = scalar_lea.vmem %s1, 48
        %v464 = vld [vmem:[%s463] sm:$0xf]
        %v465 = vld [vmem:[%s463 + $0x4] sm:$0xf]
        %v466 = vld [vmem:[%s463 + $0x8] sm:$0xf]
        %v467 = vld [vmem:[%s463 + $0xc] sm:$0xf]
        %v472 = vunpack.c.l.b16 %v459
        %v473 = vunpack.c.l.b16 %v460
        %v474 = vunpack.c.l.b16 %v461
        %v475 = vunpack.c.l.b16 %v462
        %v476 = vpack.c.b16 %v473, %v472
        %v477 = vpack.c.b16 %v475, %v474
        %v482 = vunpack.c.l.b16 %v464
        %v483 = vunpack.c.l.b16 %v465
        %v484 = vunpack.c.l.b16 %v466
        %v485 = vunpack.c.l.b16 %v467
        %v486 = vpack.c.b16 %v483, %v482
        %v487 = vpack.c.b16 %v485, %v484
        %v491 = vsel %vm201, %v476, 0
        %v494 = vsel %vm201, %v477, 0
        %496 = vmatprep.subr.bf16.mxu0 0
        %497 = vmatpush1.bf16.msra.mxu0 %v486
        %498 = vmatprep.subr.bf16.mxu0 0
        %499 = vmatpush1.bf16.msra.mxu0 %v487
        %500 = vmatprep.subr.bf16.mxu0 0
        %501 = vmatpush1.bf16.msra.mxu0 0
        %502 = vmatprep.subr.bf16.mxu0 0
        %503 = vmatpush1.bf16.msra.mxu0 0
        %504 = vmatprep.subr.bf16.mxu0 0
        %505 = vmatpush1.bf16.msra.mxu0 0
        %506 = vmatprep.subr.bf16.mxu0 0
        %507 = vmatpush1.bf16.msra.mxu0 0
        %508 = vmatprep.subr.bf16.mxu0 0
        %509 = vmatpush1.bf16.msra.mxu0 0
        %510 = vmatprep.subr.bf16.mxu0 0
        %511 = vmatpush1.bf16.msra.mxu0 0
        %512 = vmatprep.subr.bf16.mxu0 0
        %513 = vmatpush1.bf16.msra.mxu0 0
        %514 = vmatprep.subr.bf16.mxu0 0
        %515 = vmatpush1.bf16.msra.mxu0 0
        %516 = vmatprep.subr.bf16.mxu0 0
        %517 = vmatpush1.bf16.msra.mxu0 0
        %518 = vmatprep.subr.bf16.mxu0 0
        %519 = vmatpush1.bf16.msra.mxu0 0
        %520 = vmatprep.subr.bf16.mxu0 0
        %521 = vmatpush1.bf16.msra.mxu0 0
        %522 = vmatprep.subr.bf16.mxu0 0
        %523 = vmatpush1.bf16.msra.mxu0 0
        %524 = vmatprep.subr.bf16.mxu0 0
        %525 = vmatpush1.bf16.msra.mxu0 0
        %526 = vmatprep.subr.bf16.mxu0 0
        %527 = vmatpush1.bf16.msra.mxu0 0
        %528 = vmatprep.mubr.bf16.mxu0 0
        %529 = vmatmul.mubr.bf16.gmra.mrb[0].mxu0 %v491
        %v530 = vpop.f32.mrb[0].mxu0
        %v531 = vadd.f32 0.0, %v530
        %v532 = vpop.f32.mrb[0].mxu0
        %v533 = vpop.f32.mrb[0].mxu0
        %v534 = vadd.f32 0.0, %v533
        %v535 = vpop.f32.mrb[0].mxu0
        %536 = vmatprep.mubr.bf16.mxu0 0
        %537 = vmatmul.mubr.bf16.gmra.mrb[0].mxu0 %v494
        %v538 = vpop.f32.mrb[0].mxu0
        %v539 = vadd.f32 0.0, %v538
        %v540 = vpop.f32.mrb[0].mxu0
        %v541 = vpop.f32.mrb[0].mxu0
        %v542 = vadd.f32 0.0, %v541
        %v543 = vpop.f32.mrb[0].mxu0
        %544 = vdwg.mxu0
        %v545 = vld [vmem:[#allocation2] sm:$0xff]
        %v546 = vld [vmem:[#allocation2 + $0x8] sm:$0xff]
        %v547 = vld [vmem:[#allocation2 + $0x10] sm:$0xff]
        %v548 = vld [vmem:[#allocation2 + $0x18] sm:$0xff]
        %v549 = vadd.f32 %v545, %v531
        %v550 = vadd.f32 %v546, %v534
        %v551 = vadd.f32 %v547, %v539
        %v552 = vadd.f32 %v548, %v542
        %553 = vst [vmem:[#allocation2] sm:$0xff] %v549
        %554 = vst [vmem:[#allocation2 + $0x8] sm:$0xff] %v550
        %555 = vst [vmem:[#allocation2 + $0x10] sm:$0xff] %v551
        %556 = vst [vmem:[#allocation2 + $0x18] sm:$0xff] %v552
        %v557 = vld [vmem:[%s261 + $0x4] sm:$0xf]
        %v558 = vld [vmem:[%s261 + $0x8] sm:$0xf]
        %v559 = vld [vmem:[%s261 + $0xc] sm:$0xf]
        %v560 = vld [vmem:[%s261 + $0x10] sm:$0xf]
        %s561 = scalar_lea.vmem %s1, 64
        %v562 = vld [vmem:[%s561] sm:$0xf]
        %v563 = vld [vmem:[%s561 + $0x4] sm:$0xf]
        %v564 = vld [vmem:[%s561 + $0x8] sm:$0xf]
        %v565 = vld [vmem:[%s561 + $0xc] sm:$0xf]
        %v570 = vunpack.c.l.b16 %v557
        %v571 = vunpack.c.l.b16 %v558
        %v572 = vunpack.c.l.b16 %v559
        %v573 = vunpack.c.l.b16 %v560
        %v574 = vpack.c.b16 %v571, %v570
        %v575 = vpack.c.b16 %v573, %v572
        %v580 = vunpack.c.l.b16 %v562
        %v581 = vunpack.c.l.b16 %v563
        %v582 = vunpack.c.l.b16 %v564
        %v583 = vunpack.c.l.b16 %v565
        %v584 = vpack.c.b16 %v581, %v580
        %v585 = vpack.c.b16 %v583, %v582
        %v589 = vsel %vm201, %v574, 0
        %v592 = vsel %vm201, %v575, 0
        %594 = vmatprep.subr.bf16.mxu0 0
        %595 = vmatpush1.bf16.msra.mxu0 %v584
        %596 = vmatprep.subr.bf16.mxu0 0
        %597 = vmatpush1.bf16.msra.mxu0 %v585
        %598 = vmatprep.subr.bf16.mxu0 0
        %599 = vmatpush1.bf16.msra.mxu0 0
        %600 = vmatprep.subr.bf16.mxu0 0
        %601 = vmatpush1.bf16.msra.mxu0 0
        %602 = vmatprep.subr.bf16.mxu0 0
        %603 = vmatpush1.bf16.msra.mxu0 0
        %604 = vmatprep.subr.bf16.mxu0 0
        %605 = vmatpush1.bf16.msra.mxu0 0
        %606 = vmatprep.subr.bf16.mxu0 0
        %607 = vmatpush1.bf16.msra.mxu0 0
        %608 = vmatprep.subr.bf16.mxu0 0
        %609 = vmatpush1.bf16.msra.mxu0 0
        %610 = vmatprep.subr.bf16.mxu0 0
        %611 = vmatpush1.bf16.msra.mxu0 0
        %612 = vmatprep.subr.bf16.mxu0 0
        %613 = vmatpush1.bf16.msra.mxu0 0
        %614 = vmatprep.subr.bf16.mxu0 0
        %615 = vmatpush1.bf16.msra.mxu0 0
        %616 = vmatprep.subr.bf16.mxu0 0
        %617 = vmatpush1.bf16.msra.mxu0 0
        %618 = vmatprep.subr.bf16.mxu0 0
        %619 = vmatpush1.bf16.msra.mxu0 0
        %620 = vmatprep.subr.bf16.mxu0 0
        %621 = vmatpush1.bf16.msra.mxu0 0
        %622 = vmatprep.subr.bf16.mxu0 0
        %623 = vmatpush1.bf16.msra.mxu0 0
        %624 = vmatprep.subr.bf16.mxu0 0
        %625 = vmatpush1.bf16.msra.mxu0 0
        %626 = vmatprep.mubr.bf16.mxu0 0
        %627 = vmatmul.mubr.bf16.gmra.mrb[0].mxu0 %v589
        %v628 = vpop.f32.mrb[0].mxu0
        %v629 = vadd.f32 0.0, %v628
        %v630 = vpop.f32.mrb[0].mxu0
        %v631 = vpop.f32.mrb[0].mxu0
        %v632 = vadd.f32 0.0, %v631
        %v633 = vpop.f32.mrb[0].mxu0
        %634 = vmatprep.mubr.bf16.mxu0 0
        %635 = vmatmul.mubr.bf16.gmra.mrb[0].mxu0 %v592
        %v636 = vpop.f32.mrb[0].mxu0
        %v637 = vadd.f32 0.0, %v636
        %v638 = vpop.f32.mrb[0].mxu0
        %v639 = vpop.f32.mrb[0].mxu0
        %v640 = vadd.f32 0.0, %v639
        %v641 = vpop.f32.mrb[0].mxu0
        %642 = vdwg.mxu0
        %v643 = vld [vmem:[#allocation2] sm:$0xff]
        %v644 = vld [vmem:[#allocation2 + $0x8] sm:$0xff]
        %v645 = vld [vmem:[#allocation2 + $0x10] sm:$0xff]
        %v646 = vld [vmem:[#allocation2 + $0x18] sm:$0xff]
        %v647 = vadd.f32 %v643, %v629
        %v648 = vadd.f32 %v644, %v632
        %v649 = vadd.f32 %v645, %v637
        %v650 = vadd.f32 %v646, %v640
        %651 = vst [vmem:[#allocation2] sm:$0xff] %v647
        %652 = vst [vmem:[#allocation2 + $0x8] sm:$0xff] %v648
        %653 = vst [vmem:[#allocation2 + $0x10] sm:$0xff] %v649
        %654 = vst [vmem:[#allocation2 + $0x18] sm:$0xff] %v650
        %v655 = vld [vmem:[%s360 + $0x4] sm:$0xf]
        %v656 = vld [vmem:[%s360 + $0x8] sm:$0xf]
        %v657 = vld [vmem:[%s360 + $0xc] sm:$0xf]
        %v658 = vld [vmem:[%s360 + $0x10] sm:$0xf]
        %s659 = scalar_lea.vmem %s1, 80
        %v660 = vld [vmem:[%s659] sm:$0xf]
        %v661 = vld [vmem:[%s659 + $0x4] sm:$0xf]
        %v662 = vld [vmem:[%s659 + $0x8] sm:$0xf]
        %v663 = vld [vmem:[%s659 + $0xc] sm:$0xf]
        %v668 = vunpack.c.l.b16 %v655
        %v669 = vunpack.c.l.b16 %v656
        %v670 = vunpack.c.l.b16 %v657
        %v671 = vunpack.c.l.b16 %v658
        %v672 = vpack.c.b16 %v669, %v668
        %v673 = vpack.c.b16 %v671, %v670
        %v678 = vunpack.c.l.b16 %v660
        %v679 = vunpack.c.l.b16 %v661
        %v680 = vunpack.c.l.b16 %v662
        %v681 = vunpack.c.l.b16 %v663
        %v682 = vpack.c.b16 %v679, %v678
        %v683 = vpack.c.b16 %v681, %v680
        %v687 = vsel %vm201, %v672, 0
        %v690 = vsel %vm201, %v673, 0
        %692 = vmatprep.subr.bf16.mxu0 0
        %693 = vmatpush1.bf16.msra.mxu0 %v682
        %694 = vmatprep.subr.bf16.mxu0 0
        %695 = vmatpush1.bf16.msra.mxu0 %v683
        %696 = vmatprep.subr.bf16.mxu0 0
        %697 = vmatpush1.bf16.msra.mxu0 0
        %698 = vmatprep.subr.bf16.mxu0 0
        %699 = vmatpush1.bf16.msra.mxu0 0
        %700 = vmatprep.subr.bf16.mxu0 0
        %701 = vmatpush1.bf16.msra.mxu0 0
        %702 = vmatprep.subr.bf16.mxu0 0
        %703 = vmatpush1.bf16.msra.mxu0 0
        %704 = vmatprep.subr.bf16.mxu0 0
        %705 = vmatpush1.bf16.msra.mxu0 0
        %706 = vmatprep.subr.bf16.mxu0 0
        %707 = vmatpush1.bf16.msra.mxu0 0
        %708 = vmatprep.subr.bf16.mxu0 0
        %709 = vmatpush1.bf16.msra.mxu0 0
        %710 = vmatprep.subr.bf16.mxu0 0
        %711 = vmatpush1.bf16.msra.mxu0 0
        %712 = vmatprep.subr.bf16.mxu0 0
        %713 = vmatpush1.bf16.msra.mxu0 0
        %714 = vmatprep.subr.bf16.mxu0 0
        %715 = vmatpush1.bf16.msra.mxu0 0
        %716 = vmatprep.subr.bf16.mxu0 0
        %717 = vmatpush1.bf16.msra.mxu0 0
        %718 = vmatprep.subr.bf16.mxu0 0
        %719 = vmatpush1.bf16.msra.mxu0 0
        %720 = vmatprep.subr.bf16.mxu0 0
        %721 = vmatpush1.bf16.msra.mxu0 0
        %722 = vmatprep.subr.bf16.mxu0 0
        %723 = vmatpush1.bf16.msra.mxu0 0
        %724 = vmatprep.mubr.bf16.mxu0 0
        %725 = vmatmul.mubr.bf16.gmra.mrb[0].mxu0 %v687
        %v726 = vpop.f32.mrb[0].mxu0
        %v727 = vadd.f32 0.0, %v726
        %v728 = vpop.f32.mrb[0].mxu0
        %v729 = vpop.f32.mrb[0].mxu0
        %v730 = vadd.f32 0.0, %v729
        %v731 = vpop.f32.mrb[0].mxu0
        %732 = vmatprep.mubr.bf16.mxu0 0
        %733 = vmatmul.mubr.bf16.gmra.mrb[0].mxu0 %v690
        %v734 = vpop.f32.mrb[0].mxu0
        %v735 = vadd.f32 0.0, %v734
        %v736 = vpop.f32.mrb[0].mxu0
        %v737 = vpop.f32.mrb[0].mxu0
        %v738 = vadd.f32 0.0, %v737
        %v739 = vpop.f32.mrb[0].mxu0
        %740 = vdwg.mxu0
        %v741 = vld [vmem:[#allocation2] sm:$0xff]
        %v742 = vld [vmem:[#allocation2 + $0x8] sm:$0xff]
        %v743 = vld [vmem:[#allocation2 + $0x10] sm:$0xff]
        %v744 = vld [vmem:[#allocation2 + $0x18] sm:$0xff]
        %v745 = vadd.f32 %v741, %v727
        %v746 = vadd.f32 %v742, %v730
        %v747 = vadd.f32 %v743, %v735
        %v748 = vadd.f32 %v744, %v738
        %749 = vst [vmem:[#allocation2] sm:$0xff] %v745
        %750 = vst [vmem:[#allocation2 + $0x8] sm:$0xff] %v746
        %751 = vst [vmem:[#allocation2 + $0x10] sm:$0xff] %v747
        %752 = vst [vmem:[#allocation2 + $0x18] sm:$0xff] %v748
        %v753 = vld [vmem:[%s168 + $0x8] sm:$0xf]
        %v754 = vld [vmem:[%s168 + $0xc] sm:$0xf]
        %v755 = vld [vmem:[%s168 + $0x10] sm:$0xf]
        %v756 = vld [vmem:[%s168 + $0x14] sm:$0xf]
        %s757 = scalar_lea.vmem %s1, 96
        %v758 = vld [vmem:[%s757] sm:$0xf]
        %v759 = vld [vmem:[%s757 + $0x4] sm:$0xf]
        %v760 = vld [vmem:[%s757 + $0x8] sm:$0xf]
        %v761 = vld [vmem:[%s757 + $0xc] sm:$0xf]
        %v766 = vunpack.c.l.b16 %v753
        %v767 = vunpack.c.l.b16 %v754
        %v768 = vunpack.c.l.b16 %v755
        %v769 = vunpack.c.l.b16 %v756
        %v770 = vpack.c.b16 %v767, %v766
        %v771 = vpack.c.b16 %v769, %v768
        %v776 = vunpack.c.l.b16 %v758
        %v777 = vunpack.c.l.b16 %v759
        %v778 = vunpack.c.l.b16 %v760
        %v779 = vunpack.c.l.b16 %v761
        %v780 = vpack.c.b16 %v777, %v776
        %v781 = vpack.c.b16 %v779, %v778
        %v785 = vsel %vm201, %v770, 0
        %v788 = vsel %vm201, %v771, 0
        %790 = vmatprep.subr.bf16.mxu0 0
        %791 = vmatpush1.bf16.msra.mxu0 %v780
        %792 = vmatprep.subr.bf16.mxu0 0
        %793 = vmatpush1.bf16.msra.mxu0 %v781
        %794 = vmatprep.subr.bf16.mxu0 0
        %795 = vmatpush1.bf16.msra.mxu0 0
        %796 = vmatprep.subr.bf16.mxu0 0
        %797 = vmatpush1.bf16.msra.mxu0 0
        %798 = vmatprep.subr.bf16.mxu0 0
        %799 = vmatpush1.bf16.msra.mxu0 0
        %800 = vmatprep.subr.bf16.mxu0 0
        %801 = vmatpush1.bf16.msra.mxu0 0
        %802 = vmatprep.subr.bf16.mxu0 0
        %803 = vmatpush1.bf16.msra.mxu0 0
        %804 = vmatprep.subr.bf16.mxu0 0
        %805 = vmatpush1.bf16.msra.mxu0 0
        %806 = vmatprep.subr.bf16.mxu0 0
        %807 = vmatpush1.bf16.msra.mxu0 0
        %808 = vmatprep.subr.bf16.mxu0 0
        %809 = vmatpush1.bf16.msra.mxu0 0
        %810 = vmatprep.subr.bf16.mxu0 0
        %811 = vmatpush1.bf16.msra.mxu0 0
        %812 = vmatprep.subr.bf16.mxu0 0
        %813 = vmatpush1.bf16.msra.mxu0 0
        %814 = vmatprep.subr.bf16.mxu0 0
        %815 = vmatpush1.bf16.msra.mxu0 0
        %816 = vmatprep.subr.bf16.mxu0 0
        %817 = vmatpush1.bf16.msra.mxu0 0
        %818 = vmatprep.subr.bf16.mxu0 0
        %819 = vmatpush1.bf16.msra.mxu0 0
        %820 = vmatprep.subr.bf16.mxu0 0
        %821 = vmatpush1.bf16.msra.mxu0 0
        %822 = vmatprep.mubr.bf16.mxu0 0
        %823 = vmatmul.mubr.bf16.gmra.mrb[0].mxu0 %v785
        %v824 = vpop.f32.mrb[0].mxu0
        %v825 = vadd.f32 0.0, %v824
        %v826 = vpop.f32.mrb[0].mxu0
        %v827 = vpop.f32.mrb[0].mxu0
        %v828 = vadd.f32 0.0, %v827
        %v829 = vpop.f32.mrb[0].mxu0
        %830 = vmatprep.mubr.bf16.mxu0 0
        %831 = vmatmul.mubr.bf16.gmra.mrb[0].mxu0 %v788
        %v832 = vpop.f32.mrb[0].mxu0
        %v833 = vadd.f32 0.0, %v832
        %v834 = vpop.f32.mrb[0].mxu0
        %v835 = vpop.f32.mrb[0].mxu0
        %v836 = vadd.f32 0.0, %v835
        %v837 = vpop.f32.mrb[0].mxu0
        %838 = vdwg.mxu0
        %v839 = vld [vmem:[#allocation2] sm:$0xff]
        %v840 = vld [vmem:[#allocation2 + $0x8] sm:$0xff]
        %v841 = vld [vmem:[#allocation2 + $0x10] sm:$0xff]
        %v842 = vld [vmem:[#allocation2 + $0x18] sm:$0xff]
        %v843 = vadd.f32 %v839, %v825
        %v844 = vadd.f32 %v840, %v828
        %v845 = vadd.f32 %v841, %v833
        %v846 = vadd.f32 %v842, %v836
        %847 = vst [vmem:[#allocation2] sm:$0xff] %v843
        %848 = vst [vmem:[#allocation2 + $0x8] sm:$0xff] %v844
        %849 = vst [vmem:[#allocation2 + $0x10] sm:$0xff] %v845
        %850 = vst [vmem:[#allocation2 + $0x18] sm:$0xff] %v846
        %v851 = vld [vmem:[%s261 + $0x8] sm:$0xf]
        %v852 = vld [vmem:[%s261 + $0xc] sm:$0xf]
        %v853 = vld [vmem:[%s261 + $0x10] sm:$0xf]
        %v854 = vld [vmem:[%s261 + $0x14] sm:$0xf]
        %s855 = scalar_lea.vmem %s1, 112
        %v856 = vld [vmem:[%s855] sm:$0xf]
        %v857 = vld [vmem:[%s855 + $0x4] sm:$0xf]
        %v858 = vld [vmem:[%s855 + $0x8] sm:$0xf]
        %v859 = vld [vmem:[%s855 + $0xc] sm:$0xf]
        %v864 = vunpack.c.l.b16 %v851
        %v865 = vunpack.c.l.b16 %v852
        %v866 = vunpack.c.l.b16 %v853
        %v867 = vunpack.c.l.b16 %v854
        %v868 = vpack.c.b16 %v865, %v864
        %v869 = vpack.c.b16 %v867, %v866
        %v874 = vunpack.c.l.b16 %v856
        %v875 = vunpack.c.l.b16 %v857
        %v876 = vunpack.c.l.b16 %v858
        %v877 = vunpack.c.l.b16 %v859
        %v878 = vpack.c.b16 %v875, %v874
        %v879 = vpack.c.b16 %v877, %v876
        %v883 = vsel %vm201, %v868, 0
        %v886 = vsel %vm201, %v869, 0
        %888 = vmatprep.subr.bf16.mxu0 0
        %889 = vmatpush1.bf16.msra.mxu0 %v878
        %890 = vmatprep.subr.bf16.mxu0 0
        %891 = vmatpush1.bf16.msra.mxu0 %v879
        %892 = vmatprep.subr.bf16.mxu0 0
        %893 = vmatpush1.bf16.msra.mxu0 0
        %894 = vmatprep.subr.bf16.mxu0 0
        %895 = vmatpush1.bf16.msra.mxu0 0
        %896 = vmatprep.subr.bf16.mxu0 0
        %897 = vmatpush1.bf16.msra.mxu0 0
        %898 = vmatprep.subr.bf16.mxu0 0
        %899 = vmatpush1.bf16.msra.mxu0 0
        %900 = vmatprep.subr.bf16.mxu0 0
        %901 = vmatpush1.bf16.msra.mxu0 0
        %902 = vmatprep.subr.bf16.mxu0 0
        %903 = vmatpush1.bf16.msra.mxu0 0
        %904 = vmatprep.subr.bf16.mxu0 0
        %905 = vmatpush1.bf16.msra.mxu0 0
        %906 = vmatprep.subr.bf16.mxu0 0
        %907 = vmatpush1.bf16.msra.mxu0 0
        %908 = vmatprep.subr.bf16.mxu0 0
        %909 = vmatpush1.bf16.msra.mxu0 0
        %910 = vmatprep.subr.bf16.mxu0 0
        %911 = vmatpush1.bf16.msra.mxu0 0
        %912 = vmatprep.subr.bf16.mxu0 0
        %913 = vmatpush1.bf16.msra.mxu0 0
        %914 = vmatprep.subr.bf16.mxu0 0
        %915 = vmatpush1.bf16.msra.mxu0 0
        %916 = vmatprep.subr.bf16.mxu0 0
        %917 = vmatpush1.bf16.msra.mxu0 0
        %918 = vmatprep.subr.bf16.mxu0 0
        %919 = vmatpush1.bf16.msra.mxu0 0
        %920 = vmatprep.mubr.bf16.mxu0 0
        %921 = vmatmul.mubr.bf16.gmra.mrb[0].mxu0 %v883
        %v922 = vpop.f32.mrb[0].mxu0
        %v923 = vadd.f32 0.0, %v922
        %v924 = vpop.f32.mrb[0].mxu0
        %v925 = vpop.f32.mrb[0].mxu0
        %v926 = vadd.f32 0.0, %v925
        %v927 = vpop.f32.mrb[0].mxu0
        %928 = vmatprep.mubr.bf16.mxu0 0
        %929 = vmatmul.mubr.bf16.gmra.mrb[0].mxu0 %v886
        %v930 = vpop.f32.mrb[0].mxu0
        %v931 = vadd.f32 0.0, %v930
        %v932 = vpop.f32.mrb[0].mxu0
        %v933 = vpop.f32.mrb[0].mxu0
        %v934 = vadd.f32 0.0, %v933
        %v935 = vpop.f32.mrb[0].mxu0
        %936 = vdwg.mxu0
        %v937 = vld [vmem:[#allocation2] sm:$0xff]
        %v938 = vld [vmem:[#allocation2 + $0x8] sm:$0xff]
        %v939 = vld [vmem:[#allocation2 + $0x10] sm:$0xff]
        %v940 = vld [vmem:[#allocation2 + $0x18] sm:$0xff]
        %v941 = vadd.f32 %v937, %v923
        %v942 = vadd.f32 %v938, %v926
        %v943 = vadd.f32 %v939, %v931
        %v944 = vadd.f32 %v940, %v934
        %945 = vst [vmem:[#allocation2] sm:$0xff] %v941
        %946 = vst [vmem:[#allocation2 + $0x8] sm:$0xff] %v942
        %947 = vst [vmem:[#allocation2 + $0x10] sm:$0xff] %v943
        %948 = vst [vmem:[#allocation2 + $0x18] sm:$0xff] %v944
        %v949 = vld [vmem:[%s360 + $0x8] sm:$0xf]
        %v950 = vld [vmem:[%s360 + $0xc] sm:$0xf]
        %v951 = vld [vmem:[%s360 + $0x10] sm:$0xf]
        %v952 = vld [vmem:[%s360 + $0x14] sm:$0xf]
        %s953 = scalar_lea.vmem %s1, 128
        %v954 = vld [vmem:[%s953] sm:$0xf]
        %v955 = vld [vmem:[%s953 + $0x4] sm:$0xf]
        %v956 = vld [vmem:[%s953 + $0x8] sm:$0xf]
        %v957 = vld [vmem:[%s953 + $0xc] sm:$0xf]
        %v962 = vunpack.c.l.b16 %v949
        %v963 = vunpack.c.l.b16 %v950
        %v964 = vunpack.c.l.b16 %v951
        %v965 = vunpack.c.l.b16 %v952
        %v966 = vpack.c.b16 %v963, %v962
        %v967 = vpack.c.b16 %v965, %v964
        %v972 = vunpack.c.l.b16 %v954
        %v973 = vunpack.c.l.b16 %v955
        %v974 = vunpack.c.l.b16 %v956
        %v975 = vunpack.c.l.b16 %v957
        %v976 = vpack.c.b16 %v973, %v972
        %v977 = vpack.c.b16 %v975, %v974
        %v981 = vsel %vm201, %v966, 0
        %v984 = vsel %vm201, %v967, 0
        %986 = vmatprep.subr.bf16.mxu0 0
        %987 = vmatpush1.bf16.msra.mxu0 %v976
        %988 = vmatprep.subr.bf16.mxu0 0
        %989 = vmatpush1.bf16.msra.mxu0 %v977
        %990 = vmatprep.subr.bf16.mxu0 0
        %991 = vmatpush1.bf16.msra.mxu0 0
        %992 = vmatprep.subr.bf16.mxu0 0
        %993 = vmatpush1.bf16.msra.mxu0 0
        %994 = vmatprep.subr.bf16.mxu0 0
        %995 = vmatpush1.bf16.msra.mxu0 0
        %996 = vmatprep.subr.bf16.mxu0 0
        %997 = vmatpush1.bf16.msra.mxu0 0
        %998 = vmatprep.subr.bf16.mxu0 0
        %999 = vmatpush1.bf16.msra.mxu0 0
        %1000 = vmatprep.subr.bf16.mxu0 0
        %1001 = vmatpush1.bf16.msra.mxu0 0
        %1002 = vmatprep.subr.bf16.mxu0 0
        %1003 = vmatpush1.bf16.msra.mxu0 0
        %1004 = vmatprep.subr.bf16.mxu0 0
        %1005 = vmatpush1.bf16.msra.mxu0 0
        %1006 = vmatprep.subr.bf16.mxu0 0
        %1007 = vmatpush1.bf16.msra.mxu0 0
        %1008 = vmatprep.subr.bf16.mxu0 0
        %1009 = vmatpush1.bf16.msra.mxu0 0
        %1010 = vmatprep.subr.bf16.mxu0 0
        %1011 = vmatpush1.bf16.msra.mxu0 0
        %1012 = vmatprep.subr.bf16.mxu0 0
        %1013 = vmatpush1.bf16.msra.mxu0 0
        %1014 = vmatprep.subr.bf16.mxu0 0
        %1015 = vmatpush1.bf16.msra.mxu0 0
        %1016 = vmatprep.subr.bf16.mxu0 0
        %1017 = vmatpush1.bf16.msra.mxu0 0
        %1018 = vmatprep.mubr.bf16.mxu0 0
        %1019 = vmatmul.mubr.bf16.gmra.mrb[0].mxu0 %v981
        %v1020 = vpop.f32.mrb[0].mxu0
        %v1021 = vadd.f32 0.0, %v1020
        %v1022 = vpop.f32.mrb[0].mxu0
        %v1023 = vpop.f32.mrb[0].mxu0
        %v1024 = vadd.f32 0.0, %v1023
        %v1025 = vpop.f32.mrb[0].mxu0
        %1026 = vmatprep.mubr.bf16.mxu0 0
        %1027 = vmatmul.mubr.bf16.gmra.mrb[0].mxu0 %v984
        %v1028 = vpop.f32.mrb[0].mxu0
        %v1029 = vadd.f32 0.0, %v1028
        %v1030 = vpop.f32.mrb[0].mxu0
        %v1031 = vpop.f32.mrb[0].mxu0
        %v1032 = vadd.f32 0.0, %v1031
        %v1033 = vpop.f32.mrb[0].mxu0
        %1034 = vdwg.mxu0
        %v1035 = vld [vmem:[#allocation2] sm:$0xff]
        %v1036 = vld [vmem:[#allocation2 + $0x8] sm:$0xff]
        %v1037 = vld [vmem:[#allocation2 + $0x10] sm:$0xff]
        %v1038 = vld [vmem:[#allocation2 + $0x18] sm:$0xff]
        %v1039 = vadd.f32 %v1035, %v1021
        %v1040 = vadd.f32 %v1036, %v1024
        %v1041 = vadd.f32 %v1037, %v1029
        %v1042 = vadd.f32 %v1038, %v1032
        %1043 = vst [vmem:[#allocation2] sm:$0xff] %v1039
        %1044 = vst [vmem:[#allocation2 + $0x8] sm:$0xff] %v1040
        %1045 = vst [vmem:[#allocation2 + $0x10] sm:$0xff] %v1041
        %1046 = vst [vmem:[#allocation2 + $0x18] sm:$0xff] %v1042
        %v1047 = vld [vmem:[#allocation2] sm:$0xff]
        %v1048 = vld [vmem:[#allocation2 + $0x8] sm:$0xff]
        %v1049 = vld [vmem:[#allocation2 + $0x10] sm:$0xff]
        %v1050 = vld [vmem:[#allocation2 + $0x18] sm:$0xff]
        %v1052 = vlaneseq
        %v1053 = vshrl.u32 %v1052, 7
        %v1054 = vsub.s32 0, %v1053
        %v1055 = vrot.slane %v170, %v1054
        %v1057 = vadd.f32 %v1047, %v1055
        %v1058 = vadd.f32 %v1048, %v1055
        %v1059 = vadd.f32 %v1049, %v1055
        %v1060 = vadd.f32 %v1050, %v1055
        %v1061 = vmax.f32 %v1057, 0.0
        %v1062 = vmax.f32 %v1058, 0.0
        %v1063 = vmax.f32 %v1059, 0.0
        %v1064 = vmax.f32 %v1060, 0.0
        %v1065 = vpack.c.bf16 %v1062, %v1061
        %v1066 = vpack.c.bf16 %v1064, %v1063
        %v1069 = vunpack.c.l.b16 %v1065
        %v1070 = vunpack.c.h.b16 %v1065
        %v1071 = vunpack.c.l.b16 %v1066
        %v1072 = vunpack.c.h.b16 %v1066
        %v1073 = vpack.c.b16 %v1069, %v1069
        %v1074 = vpack.c.b16 %v1070, %v1070
        %v1075 = vpack.c.b16 %v1071, %v1071
        %v1076 = vpack.c.b16 %v1072, %v1072
        %1081 = vst [vmem:[%s163] sm:$0xf] %v1073
        %1082 = vst [vmem:[%s163 + $0x4] sm:$0xf] %v1074
        %1083 = vst [vmem:[%s163 + $0x8] sm:$0xf] %v1075
        %1084 = vst [vmem:[%s163 + $0xc] sm:$0xf] %v1076
        %s1085 = sand.u32 %s93, 1
        %s1086 = scalar_lea.sflag [#allocation4], %s1085
        %s1087 = sand.u32 %s93, 1
        %s1088 = smul.addr %s1087, 16
        %s1089 = scalar_lea.vmem [#allocation3], %s1088
        // Predicated region
        $region33: #{tpu_custom_call.1} parent=31 // pred_check
          %p1090 = pneg %p103
        $region34: #{tpu_custom_call.1} parent=31 // pred_check_branch
          %1092 = sbr.rel (%p1090) target = $region36
        $region35: #{tpu_custom_call.1} parent=31 // pred_region
          %s1094 = ssub.s32 256, 256
          %1095 = vsyncadd %s1086, %s1094
          %s1096 = smul.addr %s17, 4
          %s1097 = smul.addr %s1096, 64
          %s1098 = scalar_lea.hbm %s3, %s1097
          %s1099 = sshll.u32 %s1089, 4
          %s1100 = int_to_ptr.vmem [resolvable:$true] %s1099
          %1105 = dma.vmem_to_hbm [thread:$0]  %s1100, 256, %s1098, %s1086, 64, 64, 4
        $region36: #{tpu_custom_call.1} parent=31 // pred_fallthru
          _
      $region32: #{tpu_custom_call.1} parent=5 // pred_fallthru
        _
      %p1106 = scmp.le.s32.totalorder 2, %s12
      // Predicated region
      $region37: #{tpu_custom_call.1} parent=5 // pred_check
        %p1107 = pneg %p1106
      $region38: #{tpu_custom_call.1} parent=5 // pred_check_branch
        %1109 = sbr.rel (%p1107) target = $region40
      $region39: #{tpu_custom_call.1} parent=5 // pred_region
        %s1110 = ssub.s32 %s12, 2
        // Predicated region
        $region41: #{tpu_custom_call.1} parent=39 // pred_check
          %p1111 = pneg %p109
        $region42: #{tpu_custom_call.1} parent=39 // pred_check_branch
          %1113 = sbr.rel (%p1111) target = $region44
        $region43: #{tpu_custom_call.1} parent=39 // pred_region
          %s1114 = sand.u32 %s94, 1
          %s1115 = scalar_lea.sflag [#allocation4], %s1114
          %s1116 = sand.u32 %s94, 1
          %s1117 = smul.addr %s1116, 16
          %s1118 = scalar_lea.vmem [#allocation3], %s1117
          %1119 = dma.done %s1115, 256
        $region44: #{tpu_custom_call.1} parent=39 // pred_fallthru
          _
      $region40: #{tpu_custom_call.1} parent=5 // pred_fallthru
        _
    $region6: #{tpu_custom_call.1} parent=1 // loop_footer
      %s16 = sadd.s32 1, %s12
    $region7: #{tpu_custom_call.1} parent=1 // loop_footer_branch
      %11 = sbr.rel target = $region3
    $region8: #{tpu_custom_call.1} parent=1 // loop_exit
      _
    %1120 = vsyncpa [#allocation4], 1
    %s1121 = scalar_lea.sflag [#allocation4], 1
    %1122 = vsyncpa %s1121, 1

</llo_original>
